<compile_context>
chip_gen: v7x
topology: tpu7x:2x2x1
jax: 0.10.0
libtpu: 0.0.40
codegen_flags: <defaults>
</compile_context>

<pallas_src>
import jax
import jax.numpy as jnp
from jax.experimental import pallas as pl
from jax.experimental.pallas import tpu as pltpu

_LANES = 128
_TILE_ROWS = 2048          # rows per grid step: 2048*128*4 B = 1 MiB / buffer
_TARGET_STEPS = 8          # aim for >=8 grid steps on medium inputs (v7x megacore)

_INV_SQRT2 = 0.7071067811865476


def _round_up(a, b):
    return ((a + b - 1) // b) * b


def _ssfg_kernel(w_ref, x_ref, o_ref):
    # w_ref: SMEM f32[4] = [0.5*w_g, w_g/sqrt(2), w_r + w_e, w_e]  (normalized)
    #   w_g multiplies gelu(x) (module's weight_relu),
    #   w_r multiplies relu(x) (module's weight_tanh),
    #   w_e multiplies elu(x)  (module's weight_elu).
    # x_ref, o_ref: VMEM (tile_rows, 128) tiles.
    x = x_ref[...].astype(jnp.float32)
    h_g = w_ref[0]
    c_g = w_ref[1]
    w_re = w_ref[2]
    w_e = w_ref[3]

    # ---- exact (erf-based) GELU contribution, sign-free form --------------
    #   w_g * gelu(x) = (0.5*w_g)*x + (w_g/sqrt(2)) * az * erf(az),
    #   az = |x|/sqrt(2).  erf via Abramowitz & Stegun 7.1.26 (|err|<=1.5e-7).
    az = jnp.abs(x) * _INV_SQRT2
    d = 1.0 + 0.3275911 * az
    t = pl.reciprocal(d, approx=True)          # EUP slot
    t = t * (2.0 - d * t)                      # one Newton step -> f32 accuracy
    poly = t * (0.254829592 +
                t * (-0.284496736 +
                     t * (1.421413741 +
                          t * (-1.453152027 + t * 1.061405429))))
    erf_abs = 1.0 - poly * jnp.exp(-az * az)   # exp -> EUP slot

    # ---- ReLU/ELU merged tail ---------------------------------------------
    # For x > 0 both relu(x) and elu(x) equal x; for x <= 0 relu is 0 and
    # elu(x) = exp(x) - 1.  (The exp of the untaken positive branch is
    # discarded by the select.)
    neg_mix = w_e * (jnp.exp(x) - 1.0)
    tail = jnp.where(x > 0.0, w_re * x, neg_mix)

    mixed = h_g * x + c_g * (az * erf_abs) + tail   # weights already normalized
    o_ref[...] = mixed.astype(o_ref.dtype)


def _ssfg_mix_jnp(x, w_norm):
    """Plain-jnp fallback for the ragged (<128 elem) tail — same semantics."""
    gelu = jax.nn.gelu(x, approximate=False)
    relu = jnp.maximum(x, 0.0)
    elu = jnp.where(x > 0.0, x, jnp.expm1(x))
    return w_norm[0] * gelu + w_norm[1] * relu + w_norm[2] * elu


def ssfg_forward(x, weight_relu, weight_tanh, weight_elu):
    """SSFG forward. x: any shape (e.g. NCHW); weights: scalar / (1,) params."""
    orig_shape = x.shape
    dtype = x.dtype
    flat = x.reshape(-1)
    n = flat.shape[0]

    # Fold the "/ total_weight" normalization into the weights host-side.
    w = jnp.stack([jnp.asarray(weight_relu).reshape(()),
                   jnp.asarray(weight_tanh).reshape(()),
                   jnp.asarray(weight_elu).reshape(())]).astype(jnp.float32)
    w_norm = w / jnp.sum(w)
    w_g, w_r, w_e = w_norm[0], w_norm[1], w_norm[2]
    # Packed SMEM scalars: [0.5*w_g, w_g/sqrt(2), w_r + w_e, w_e]
    w_packed = jnp.stack([0.5 * w_g, w_g * _INV_SQRT2, w_r + w_e, w_e])

    n_main = (n // _LANES) * _LANES            # only n % 128 goes to the tail

    pieces = []
    if n_main > 0:
        rows = n_main // _LANES
        x2d = flat[:n_main].reshape(rows, _LANES)

        if rows >= 16:
            # Multi-step grid: tile rows a multiple of 8 (last block may be
            # ragged -> masked by Pallas).  Aim for >= _TARGET_STEPS steps so
            # the "parallel" axis shards across both v7x TensorCores, but cap
            # at _TILE_ROWS to keep VMEM footprint small and pipelined.
            tile_r = min(_TILE_ROWS,
                         max(8, _round_up(pl.cdiv(rows, _TARGET_STEPS), 8)))
        else:
            tile_r = rows                       # single block == full dim (legal)

        out2d = pl.pallas_call(
            _ssfg_kernel,
            out_shape=jax.ShapeDtypeStruct((rows, _LANES), dtype),
            grid=(pl.cdiv(rows, tile_r),),
            in_specs=[
                pl.BlockSpec(memory_space=pltpu.MemorySpace.SMEM),   # weights
                pl.BlockSpec((tile_r, _LANES), lambda i: (i, 0)),    # x tile
            ],
            out_specs=pl.BlockSpec((tile_r, _LANES), lambda i: (i, 0)),
            compiler_params=pltpu.CompilerParams(
                dimension_semantics=("parallel",)),
        )(w_packed, x2d)
        pieces.append(out2d.reshape(-1))

    if n_main < n:
        # Ragged tail (< 128 elements): plain jnp, no pad/slice round trip.
        tail = flat[n_main:].astype(jnp.float32)
        pieces.append(_ssfg_mix_jnp(tail, w_norm).astype(dtype))

    out = pieces[0] if len(pieces) == 1 else jnp.concatenate(pieces)
    return out.reshape(orig_shape)


def _ssfg_reference(x, weight_relu, weight_tanh, weight_elu):
    """Plain-JAX reference mirroring the PyTorch module literally."""
    relu_output = jax.nn.gelu(x, approximate=False)    # F.gelu (exact)
    tanh_output = jax.nn.relu(x)                       # F.relu
    elu_output = jnp.where(x > 0.0, x, jnp.expm1(x))   # F.elu, alpha=1
    mixed = (weight_relu * relu_output
             + weight_tanh * tanh_output
             + weight_elu * elu_output)
    total = weight_relu + weight_tanh + weight_elu
    return mixed / total


if __name__ == "__main__":
    key = jax.random.PRNGKey(0)
    k_x, k_w = jax.random.split(key)

    # Small NCHW activation, consistent with a conv-net feature map.
    x = jax.random.normal(k_x, (2, 4, 16, 16), dtype=jnp.float32)

    # Module params init to 0.5 each; perturb deterministically so the
    # per-branch weighting is actually exercised.
    w = 0.5 + 0.3 * jax.random.uniform(k_w, (3,), dtype=jnp.float32)
    weight_relu = w[0:1]
    weight_tanh = w[1:2]
    weight_elu = w[2:3]

    out = ssfg_forward(x, weight_relu, weight_tanh, weight_elu)
    out = jax.block_until_ready(out)

    ref = _ssfg_reference(x, weight_relu, weight_tanh, weight_elu)
    assert out.shape == x.shape and out.dtype == x.dtype
    assert jnp.allclose(out, ref, rtol=1e-5, atol=1e-5), "mismatch vs reference"

    print("KERNEL_OK")
</pallas_src>

<mosaic_0001>
module attributes {stable_mosaic.version = 11 : i64} {
  func.func @_ssfg_kernel(%arg0: i32, %arg1: memref<4xf32, #tpu.memory_space<smem>>, %arg2: memref<8x128xf32, #tpu.memory_space<vmem>>, %arg3: memref<8x128xf32, #tpu.memory_space<vmem>>) attributes {dimension_semantics = [#tpu.dimension_semantics<parallel>], iteration_bounds = array<i64: 2>, scalar_prefetch = 0 : i64, scratch_operands = 0 : i64, tpu.core_type = #tpu.core_type<tc>, window_params = [{transform_indices = @transform_0, window_bounds = array<i64: 4>}, {transform_indices = @transform_1, window_bounds = array<i64: 8, 128>}, {transform_indices = @transform_2, window_bounds = array<i64: 8, 128>}]} {
    %c0 = arith.constant 0 : index
    %c0_0 = arith.constant 0 : index
    %0 = vector.load %arg2[%c0, %c0_0] : memref<8x128xf32, #tpu.memory_space<vmem>>, vector<8x128xf32>
    %c0_1 = arith.constant 0 : index
    %1 = memref.load %arg1[%c0_1] : memref<4xf32, #tpu.memory_space<smem>>
    %c1 = arith.constant 1 : index
    %2 = memref.load %arg1[%c1] : memref<4xf32, #tpu.memory_space<smem>>
    %c2 = arith.constant 2 : index
    %3 = memref.load %arg1[%c2] : memref<4xf32, #tpu.memory_space<smem>>
    %c3 = arith.constant 3 : index
    %4 = memref.load %arg1[%c3] : memref<4xf32, #tpu.memory_space<smem>>
    %5 = math.absf %0 : vector<8x128xf32>
    %cst = arith.constant 0.707106769 : f32
    %6 = vector.broadcast %cst : f32 to vector<8x128xf32>
    %7 = arith.mulf %5, %6 : vector<8x128xf32>
    %cst_2 = arith.constant 0.327591091 : f32
    %8 = vector.broadcast %cst_2 : f32 to vector<8x128xf32>
    %9 = arith.mulf %8, %7 : vector<8x128xf32>
    %cst_3 = arith.constant 1.000000e+00 : f32
    %10 = vector.broadcast %cst_3 : f32 to vector<8x128xf32>
    %11 = arith.addf %10, %9 : vector<8x128xf32>
    %12 = tpu.reciprocal %11 {approx = true} : vector<8x128xf32> -> vector<8x128xf32>
    %13 = arith.mulf %11, %12 : vector<8x128xf32>
    %cst_4 = arith.constant 2.000000e+00 : f32
    %14 = vector.broadcast %cst_4 : f32 to vector<8x128xf32>
    %15 = arith.subf %14, %13 : vector<8x128xf32>
    %16 = arith.mulf %12, %15 : vector<8x128xf32>
    %cst_5 = arith.constant 1.06140542 : f32
    %17 = vector.broadcast %cst_5 : f32 to vector<8x128xf32>
    %18 = arith.mulf %16, %17 : vector<8x128xf32>
    %cst_6 = arith.constant -1.45315206 : f32
    %19 = vector.broadcast %cst_6 : f32 to vector<8x128xf32>
    %20 = arith.addf %19, %18 : vector<8x128xf32>
    %21 = arith.mulf %16, %20 : vector<8x128xf32>
    %cst_7 = arith.constant 1.42141378 : f32
    %22 = vector.broadcast %cst_7 : f32 to vector<8x128xf32>
    %23 = arith.addf %22, %21 : vector<8x128xf32>
    %24 = arith.mulf %16, %23 : vector<8x128xf32>
    %cst_8 = arith.constant -0.284496725 : f32
    %25 = vector.broadcast %cst_8 : f32 to vector<8x128xf32>
    %26 = arith.addf %25, %24 : vector<8x128xf32>
    %27 = arith.mulf %16, %26 : vector<8x128xf32>
    %cst_9 = arith.constant 0.254829586 : f32
    %28 = vector.broadcast %cst_9 : f32 to vector<8x128xf32>
    %29 = arith.addf %28, %27 : vector<8x128xf32>
    %30 = arith.mulf %16, %29 : vector<8x128xf32>
    %cst_10 = arith.constant 0.000000e+00 : f32
    %31 = vector.broadcast %cst_10 : f32 to vector<8x128xf32>
    %32 = arith.subf %31, %7 : vector<8x128xf32>
    %33 = arith.mulf %32, %7 : vector<8x128xf32>
    %34 = math.exp %33 : vector<8x128xf32>
    %35 = arith.mulf %30, %34 : vector<8x128xf32>
    %cst_11 = arith.constant 1.000000e+00 : f32
    %36 = vector.broadcast %cst_11 : f32 to vector<8x128xf32>
    %37 = arith.subf %36, %35 : vector<8x128xf32>
    %38 = math.exp %0 : vector<8x128xf32>
    %cst_12 = arith.constant 1.000000e+00 : f32
    %39 = vector.broadcast %cst_12 : f32 to vector<8x128xf32>
    %40 = arith.subf %38, %39 : vector<8x128xf32>
    %41 = vector.broadcast %4 : f32 to vector<8x128xf32>
    %42 = arith.mulf %41, %40 : vector<8x128xf32>
    %cst_13 = arith.constant 0.000000e+00 : f32
    %43 = vector.broadcast %cst_13 : f32 to vector<8x128xf32>
    %44 = arith.cmpf ogt, %0, %43 : vector<8x128xf32>
    %45 = vector.broadcast %3 : f32 to vector<8x128xf32>
    %46 = arith.mulf %45, %0 : vector<8x128xf32>
    %47 = arith.select %44, %46, %42 : vector<8x128xi1>, vector<8x128xf32>
    %48 = vector.broadcast %1 : f32 to vector<8x128xf32>
    %49 = arith.mulf %48, %0 : vector<8x128xf32>
    %50 = arith.mulf %7, %37 : vector<8x128xf32>
    %51 = vector.broadcast %2 : f32 to vector<8x128xf32>
    %52 = arith.mulf %51, %50 : vector<8x128xf32>
    %53 = arith.addf %49, %52 : vector<8x128xf32>
    %54 = arith.addf %53, %47 : vector<8x128xf32>
    %c0_14 = arith.constant 0 : index
    %c0_15 = arith.constant 0 : index
    %55 = vector.load %arg3[%c0_14, %c0_15] : memref<8x128xf32, #tpu.memory_space<vmem>>, vector<8x128xf32>
    tpu.vector_store %arg3[%c0_14, %c0_15], %54 {strides = array<i32>} : memref<8x128xf32, #tpu.memory_space<vmem>>, vector<8x128xf32>,
    return
  }
  func.func @transform_0(%arg0: i32) -> i32 {
    %c0_i32 = arith.constant 0 : i32
    %c0_i32_0 = arith.constant 0 : i32
    return %c0_i32 : i32
  }
  func.func @transform_1(%arg0: i32) -> (i32, i32) {
    %c0_i32 = arith.constant 0 : i32
    %c0_i32_0 = arith.constant 0 : i32
    return %arg0, %c0_i32 : i32, i32
  }
  func.func @transform_2(%arg0: i32) -> (i32, i32) {
    %c0_i32 = arith.constant 0 : i32
    %c0_i32_0 = arith.constant 0 : i32
    return %arg0, %c0_i32 : i32, i32
  }
}

</mosaic_0001>

<llo_original>
// kernel: tpu_custom_call.1
$region0: #{tpu_custom_call.1}
  #allocation0 [shape = 'u32[]', space=smem, size = 0x4, offset = 0x4, fixed_abs, tag = 'smem constant byte address 0x4 - core index']
  #allocation1 [shape = 'u32[144,128]{1,0:T(1,128)}', space=vmem, size = 0x12000, scoped, tag = 'internal scratch']
  %s0 = inlined_call_operand.hbm [shape: f32[4], index: 0, kind: input, shape index: {}]
  %s1 = inlined_call_operand.hbm [shape: f32[16,128], index: 1, kind: input, shape index: {}]
  %s2 = inlined_call_operand.hbm [shape: f32[16,128], index: 2, kind: output, shape index: {}]
  %s3 = sld [smem:[#allocation0]]
  $region49: #{tpu_custom_call.1} parent=0
    _
  %s5 = ssub.s32 1, %s3
  %s6 = scalar_select 0, %s5, %s3
  $region1: #{tpu_custom_call.1} parent=0
    #allocation2 [shape = 'u8[512]{0}', space=smem, size = 0x200, scoped, tag = 'input window, operand 0, single buffered']
    #allocation3 [shape = 's32[2]{0}', space=sflag, size = 0x8, scoped, tag = 'scoped memory for tpu_custom_call.1']
    #allocation4 [shape = 's32[2]{0}', space=sflag, size = 0x8, scoped, tag = 'scoped memory for tpu_custom_call.1']
    #allocation5 [shape = 's32[2]{0}', space=sflag, size = 0x8, scoped, tag = 'scoped memory for tpu_custom_call.1']
    #allocation6 [shape = 'u8[8192]{0}', space=vmem, size = 0x2000, scoped, tag = 'input window, operand 1']
    #allocation7 [shape = 'u8[8192]{0}', space=vmem, size = 0x2000, scoped, tag = 'output window, operand 0']
    %7 = vsyncpa [#allocation5], 0
    %8 = vsyncpa [#allocation3], 0
    %s9 = scalar_lea.sflag [#allocation3], 1
    %10 = vsyncpa %s9, 0
    %11 = vsyncpa [#allocation4], 0
    %s12 = scalar_lea.sflag [#allocation4], 1
    %13 = vsyncpa %s12, 0
    loop: start=0, step=1, limit=4
    $region2: #{tpu_custom_call.1} parent=1 // loop_pre_header
      _
    $region3: #{tpu_custom_call.1} parent=1 // loop_header
      %s15 = sphi 0, %s19
      %p16 = scmp.ge.s32.totalorder %s15, 4
      %s23 = sphi 0, %s23
      %s25 = sphi 0, %s23
      %s26 = sphi 0, %s25
      %s40 = sphi 0, %s26
      %s46 = sphi 0, %s48
      %s49 = sphi 0, %s46
      %s50 = sphi 0, %s49
      %s66 = sphi 0, %s50
      %s72 = sphi 0, %s74
      %s75 = sphi 0, %s72
      %s76 = sphi 0, %s75
      %s92 = sphi 0, %s76
    $region4: #{tpu_custom_call.1} parent=1 // loop_header_branch
      %18 = sbr.rel (%p16) target = $region8
    $region5: #{tpu_custom_call.1} parent=1 // loop_body
      %s20 = ssub.s32 %s15, 1
      %s21 = ssub.s32 %s15, 2
      %s22 = sadd.s32 %s15, 1
      %s24 = sadd.s32 %s23, 1
      %p27 = scmp.eq.s32.totalorder %s15, 1
      %p28 = scmp.ne.s32.totalorder %s23, %s25
      %p29 = scmp.eq.s32.totalorder %s15, 0
      %p30 = por %p28, %p29
      %p31 = scmp.ne.s32.totalorder %s23, %s25
      %p32 = scmp.eq.s32.totalorder %s20, 1
      %p33 = por %p31, %p32
      %p34 = scmp.ne.s32.totalorder %s25, %s26
      %p35 = scmp.eq.s32.totalorder %s20, 0
      %p36 = por %p34, %p35
      %p37 = scmp.ne.s32.totalorder %s25, %s26
      %p38 = scmp.eq.s32.totalorder %s21, 1
      %p39 = por %p37, %p38
      %p41 = scmp.ne.s32.totalorder %s26, %s40
      %p42 = scmp.eq.s32.totalorder %s21, 0
      %p43 = por %p41, %p42
      %s44 = ssub.s32 %s15, %s22
      %p45 = scmp.eq.s32.totalorder %s44, 0
      %s47 = sadd.s32 %s46, 1
      %s48 = scalar_select %p45, %s46, %s47
      %p51 = pneg %p45
      %p52 = scmp.eq.s32.totalorder %s15, 1
      %p53 = por %p51, %p52
      %p54 = scmp.ne.s32.totalorder %s46, %s49
      %p55 = scmp.eq.s32.totalorder %s15, 0
      %p56 = por %p54, %p55
      %p57 = scmp.ne.s32.totalorder %s46, %s49
      %p58 = scmp.eq.s32.totalorder %s20, 1
      %p59 = por %p57, %p58
      %p60 = scmp.ne.s32.totalorder %s49, %s50
      %p61 = scmp.eq.s32.totalorder %s20, 0
      %p62 = por %p60, %p61
      %p63 = scmp.ne.s32.totalorder %s49, %s50
      %p64 = scmp.eq.s32.totalorder %s21, 1
      %p65 = por %p63, %p64
      %p67 = scmp.ne.s32.totalorder %s50, %s66
      %p68 = scmp.eq.s32.totalorder %s21, 0
      %p69 = por %p67, %p68
      %s70 = ssub.s32 %s15, %s22
      %p71 = scmp.eq.s32.totalorder %s70, 0
      %s73 = sadd.s32 %s72, 1
      %s74 = scalar_select %p71, %s72, %s73
      %p77 = pneg %p71
      %p78 = scmp.eq.s32.totalorder %s15, 1
      %p79 = por %p77, %p78
      %p80 = scmp.ne.s32.totalorder %s72, %s75
      %p81 = scmp.eq.s32.totalorder %s15, 0
      %p82 = por %p80, %p81
      %p83 = scmp.ne.s32.totalorder %s72, %s75
      %p84 = scmp.eq.s32.totalorder %s20, 1
      %p85 = por %p83, %p84
      %p86 = scmp.ne.s32.totalorder %s75, %s76
      %p87 = scmp.eq.s32.totalorder %s20, 0
      %p88 = por %p86, %p87
      %p89 = scmp.ne.s32.totalorder %s75, %s76
      %p90 = scmp.eq.s32.totalorder %s21, 1
      %p91 = por %p89, %p90
      %p93 = scmp.ne.s32.totalorder %s76, %s92
      %p94 = scmp.eq.s32.totalorder %s21, 0
      %p95 = por %p93, %p94
      %p96 = scmp.le.s32.totalorder 1, %s15
      %p97 = scmp.lt.s32.totalorder %s15, 3
      %p98 = pnand %p96, %p97
      %p99 = pneg %p98
      // Predicated region
      $region9: #{tpu_custom_call.1} parent=5 // pred_check
        _
      $region10: #{tpu_custom_call.1} parent=5 // pred_check_branch
        %101 = sbr.rel (%p98) target = $region12
      $region11: #{tpu_custom_call.1} parent=5 // pred_region
        %s102 = ssub.s32 %s15, 1
        // Predicated region
        $region13: #{tpu_custom_call.1} parent=11 // pred_check
          %p103 = pneg %p36
        $region14: #{tpu_custom_call.1} parent=11 // pred_check_branch
          %105 = sbr.rel (%p103) target = $region16
        $region15: #{tpu_custom_call.1} parent=11 // pred_region
          %s107 = ssub.s32 16, 16
          %108 = vsyncadd [#allocation5], %s107
          %111 = dma.hbm_to_smem %s0, 16, [#allocation2], [#allocation5]
        $region16: #{tpu_custom_call.1} parent=11 // pred_fallthru
          _
      $region12: #{tpu_custom_call.1} parent=5 // pred_fallthru
        _
      %p112 = scmp.lt.s32.totalorder %s15, 2
      // Predicated region
      $region17: #{tpu_custom_call.1} parent=5 // pred_check
        %p113 = pneg %p112
      $region18: #{tpu_custom_call.1} parent=5 // pred_check_branch
        %115 = sbr.rel (%p113) target = $region20
      $region19: #{tpu_custom_call.1} parent=5 // pred_region
        // Predicated region
        $region21: #{tpu_custom_call.1} parent=19 // pred_check
          %p116 = pneg %p56
        $region22: #{tpu_custom_call.1} parent=19 // pred_check_branch
          %118 = sbr.rel (%p116) target = $region24
        $region23: #{tpu_custom_call.1} parent=19 // pred_region
          %s119 = sand.u32 %s46, 1
          %s120 = scalar_lea.sflag [#allocation3], %s119
          %s121 = sand.u32 %s46, 1
          %s122 = smul.addr %s121, 8
          %s123 = scalar_lea.vmem [#allocation6], %s122
          %s125 = ssub.s32 128, 128
          %126 = vsyncadd %s120, %s125
          %s127 = smul.addr %s15, 128
          %s128 = scalar_lea.hbm %s1, %s127
          %s130 = sshll.u32 %s123, 4
          %s131 = int_to_ptr.vmem [resolvable:$true] %s130
          %133 = dma.hbm_to_vmem [thread:$0]  %s128, 128, %s131, %s120
        $region24: #{tpu_custom_call.1} parent=19 // pred_fallthru
          _
      $region20: #{tpu_custom_call.1} parent=5 // pred_fallthru
        _
      %p134 = scmp.le.s32.totalorder 1, %s15
      %p135 = scmp.lt.s32.totalorder %s15, 3
      %p136 = pnand %p134, %p135
      %p137 = pneg %p136
      // Predicated region
      $region25: #{tpu_custom_call.1} parent=5 // pred_check
        _
      $region26: #{tpu_custom_call.1} parent=5 // pred_check_branch
        %139 = sbr.rel (%p136) target = $region28
      $region27: #{tpu_custom_call.1} parent=5 // pred_region
        %s140 = ssub.s32 %s15, 1
        // Predicated region
        $region29: #{tpu_custom_call.1} parent=27 // pred_check
          %p141 = pneg %p36
        $region30: #{tpu_custom_call.1} parent=27 // pred_check_branch
          %143 = sbr.rel (%p141) target = $region32
        $region31: #{tpu_custom_call.1} parent=27 // pred_region
          %144 = dma.done [#allocation5], 16
        $region32: #{tpu_custom_call.1} parent=27 // pred_fallthru
          _
        %s145 = sand.u32 %s49, 1
        %s146 = scalar_lea.sflag [#allocation3], %s145
        %s147 = sand.u32 %s49, 1
        %s148 = smul.addr %s147, 8
        %s149 = scalar_lea.vmem [#allocation6], %s148
        // Predicated region
        $region33: #{tpu_custom_call.1} parent=27 // pred_check
          %p150 = pneg %p62
        $region34: #{tpu_custom_call.1} parent=27 // pred_check_branch
          %152 = sbr.rel (%p150) target = $region36
        $region35: #{tpu_custom_call.1} parent=27 // pred_region
          %153 = dma.done %s146, 128
        $region36: #{tpu_custom_call.1} parent=27 // pred_fallthru
          _
        %154 = sfence
        %p155 = pneg %p36
        %p156 = pneg %p33
        %s157 = sand.u32 %s49, 1
        %s158 = scalar_lea.sflag [#allocation3], %s157
        %s159 = sand.u32 %s49, 1
        %s160 = smul.addr %s159, 8
        %s161 = scalar_lea.vmem [#allocation6], %s160
        %p162 = pneg %p62
        %p163 = pneg %p59
        %p164 = pneg %p88
        %p165 = pneg %p85
        %s166 = sand.u32 %s75, 1
        %s167 = scalar_lea.sflag [#allocation4], %s166
        %s168 = sand.u32 %s75, 1
        %s169 = smul.addr %s168, 8
        %s170 = scalar_lea.vmem [#allocation7], %s169
        %v171 = vld [vmem:[%s149] sm:$0xff]
        %s172 = sld [smem:[#allocation2]]
        %s173 = sld [smem:[#allocation2 + $0x1]]
        %s174 = sld [smem:[#allocation2 + $0x2]]
        %s175 = sld [smem:[#allocation2 + $0x3]]
        %v176 = vand.u32 2147483647, %v171
        %v177 = vmul.f32 %v176, 0.70710677
        %v178 = vmul.f32 %v177, 0.3275911
        %v179 = vadd.f32 %v178, 1.0
        %v180 = vrcp.pop %v179
        %v181 = vmul.f32 %v179, %v180
        %v182 = vsub.f32 2.0, %v181
        %v183 = vmul.f32 %v180, %v182
        %v184 = vmul.f32 %v183, 1.0614054
        %v185 = vadd.f32 %v184, -1.4531521
        %v186 = vmul.f32 %v183, %v185
        %v187 = vadd.f32 %v186, 1.4214138
        %v188 = vmul.f32 %v183, %v187
        %v189 = vadd.f32 %v188, -0.28449672
        %v190 = vmul.f32 %v183, %v189
        %v191 = vadd.f32 %v190, 0.2548296
        %v192 = vmul.f32 %v183, %v191
        %v193 = vsub.f32 0.0, %v177
        %v194 = vmul.f32 %v193, %v177
        %v195 = vmul.f32 %v194, 1.442695
        %v196 = vpow.pop %v195
        %v197 = vmul.f32 %v192, %v196
        %v198 = vsub.f32 1.0, %v197
        %v199 = vmul.f32 %v171, 1.442695
        %v200 = vpow.pop %v199
        %v201 = vsub.f32 %v200, 1.0
        %v202 = vstv %s175
        %v203 = vmul.f32 %v202, %v201
        %vm204 = vcmp.gt.f32.partialorder %v171, 0.0
        %v205 = vstv %s174
        %v206 = vmul.f32 %v205, %v171
        %v207 = vsel %vm204, %v206, %v203
        %v208 = vstv %s172
        %v209 = vmul.f32 %v208, %v171
        %v210 = vmul.f32 %v177, %v198
        %v211 = vstv %s173
        %v212 = vmul.f32 %v211, %v210
        %v213 = vadd.f32 %v209, %v212
        %v214 = vadd.f32 %v213, %v207
        %215 = vst [vmem:[%s170] sm:$0xff] %v214
        %s216 = sand.u32 %s75, 1
        %s217 = scalar_lea.sflag [#allocation4], %s216
        %s218 = sand.u32 %s75, 1
        %s219 = smul.addr %s218, 8
        %s220 = scalar_lea.vmem [#allocation7], %s219
        // Predicated region
        $region37: #{tpu_custom_call.1} parent=27 // pred_check
          %p221 = pneg %p85
        $region38: #{tpu_custom_call.1} parent=27 // pred_check_branch
          %223 = sbr.rel (%p221) target = $region40
        $region39: #{tpu_custom_call.1} parent=27 // pred_region
          %s225 = ssub.s32 128, 128
          %226 = vsyncadd %s217, %s225
          %s227 = smul.addr %s20, 128
          %s228 = scalar_lea.hbm %s2, %s227
          %s230 = sshll.u32 %s220, 4
          %s231 = int_to_ptr.vmem [resolvable:$true] %s230
          %233 = dma.vmem_to_hbm [thread:$0]  %s231, 128, %s228, %s217
        $region40: #{tpu_custom_call.1} parent=27 // pred_fallthru
          _
      $region28: #{tpu_custom_call.1} parent=5 // pred_fallthru
        _
      %p234 = scmp.le.s32.totalorder 2, %s15
      // Predicated region
      $region41: #{tpu_custom_call.1} parent=5 // pred_check
        %p235 = pneg %p234
      $region42: #{tpu_custom_call.1} parent=5 // pred_check_branch
        %237 = sbr.rel (%p235) target = $region44
      $region43: #{tpu_custom_call.1} parent=5 // pred_region
        %s238 = ssub.s32 %s15, 2
        // Predicated region
        $region45: #{tpu_custom_call.1} parent=43 // pred_check
          %p239 = pneg %p91
        $region46: #{tpu_custom_call.1} parent=43 // pred_check_branch
          %241 = sbr.rel (%p239) target = $region48
        $region47: #{tpu_custom_call.1} parent=43 // pred_region
          %s242 = sand.u32 %s76, 1
          %s243 = scalar_lea.sflag [#allocation4], %s242
          %s244 = sand.u32 %s76, 1
          %s245 = smul.addr %s244, 8
          %s246 = scalar_lea.vmem [#allocation7], %s245
          %247 = dma.done %s243, 128
        $region48: #{tpu_custom_call.1} parent=43 // pred_fallthru
          _
      $region44: #{tpu_custom_call.1} parent=5 // pred_fallthru
        _
    $region6: #{tpu_custom_call.1} parent=1 // loop_footer
      %s19 = sadd.s32 1, %s15
    $region7: #{tpu_custom_call.1} parent=1 // loop_footer_branch
      %14 = sbr.rel target = $region3
    $region8: #{tpu_custom_call.1} parent=1 // loop_exit
      _
    %248 = vsyncpa [#allocation3], 1
    %s249 = scalar_lea.sflag [#allocation3], 1
    %250 = vsyncpa %s249, 1
    %251 = vsyncpa [#allocation4], 1
    %s252 = scalar_lea.sflag [#allocation4], 1
    %253 = vsyncpa %s252, 1
    %254 = vsyncpa [#allocation5], 1
    %s255 = scalar_lea.sflag [#allocation5], 1
    %256 = vsyncpa %s255, 1

</llo_original>
